<compile_context>
chip_gen: v6e
topology: v6e:2x2x1
jax: 0.10.0
libtpu: 0.0.40
codegen_flags: <defaults>
</compile_context>

<pallas_src>
import functools

import jax
import jax.numpy as jnp
from jax.experimental import pallas as pl
from jax.experimental.pallas import tpu as pltpu


def _round_up(x, m):
    return (x + m - 1) // m * m


def _stats_kernel(emb_blocks, idx_ref, num_ref, cnt_ref, nsum_ref, nsq_ref):
    """Phase 1: per-tile partial batch statistics (no feature matrix materialized).

    idx_ref  : (Bt, n_emb) i32  indices pre-shifted into stacked-row space (-1 = padded row)
    num_ref  : (Bt, NUMP)  f32  numeric values in the first n_num lanes, 0 elsewhere
    cnt_ref  : (1, 1, K_pad) f32 per-tile histogram of stacked-row hits
    nsum_ref : (1, 1, NUMP)  f32 per-tile sum of the numeric block
    nsq_ref  : (1, 1, NUMP)  f32 per-tile sum of squares of the numeric block
    """
    f32 = jnp.float32
    idx = idx_ref[...]                                    # (Bt, n_emb)
    bt = idx.shape[0]
    ones = jnp.ones((1, bt), f32)                         # MXU is idle in this pass

    for kb, tabs in enumerate(emb_blocks):                # static per-128-row-window loop
        base = kb * 128
        if tabs:
            iota = jax.lax.broadcasted_iota(jnp.int32, (bt, 128), 1) + base
            ohb = jnp.zeros((bt, 128), f32)
            for j in tabs:                                # one-hot build kept in f32 (v5e VPU)
                ohb = ohb + (iota == idx[:, j:j + 1]).astype(f32)
            cnt_ref[0, :, base:base + 128] = jnp.dot(ones, ohb,
                                                     preferred_element_type=f32)
        else:
            cnt_ref[0, :, base:base + 128] = jnp.zeros((1, 128), f32)

    num = num_ref[...]                                    # (Bt, NUMP)
    nsum_ref[0] = jnp.dot(ones, num, preferred_element_type=f32)
    nsq_ref[0] = jnp.dot(ones, num * num, preferred_element_type=f32)


def _apply_kernel(emb_blocks, mxu_dtype, idx_ref, num_ref, w_ref,
                  scale_e_ref, shift_e_ref, scale_n_ref, shift_n_ref,
                  out_e_ref, out_n_ref):
    """Phase 2: windowed one-hot gather matmul + fused affine BatchNorm apply."""
    f32 = jnp.float32
    idx = idx_ref[...]
    bt = idx.shape[0]
    fp = out_e_ref.shape[1]

    acc = jnp.zeros((bt, fp), f32)
    for kb, tabs in enumerate(emb_blocks):                # static per-window loop
        if not tabs:
            continue
        base = kb * 128
        iota = jax.lax.broadcasted_iota(jnp.int32, (bt, 128), 1) + base
        ohb = jnp.zeros((bt, 128), f32)
        for j in tabs:
            ohb = ohb + (iota == idx[:, j:j + 1]).astype(f32)
        acc = acc + jnp.dot(ohb.astype(mxu_dtype),        # 0/1 values exact in bf16
                            w_ref[base:base + 128, :],
                            preferred_element_type=f32)

    # Fused affine normalization: out = x * scale + shift (scale/shift precomputed).
    out_e_ref[...] = acc * scale_e_ref[...] + shift_e_ref[...]
    out_n_ref[...] = num_ref[...] * scale_n_ref[...] + shift_n_ref[...]


def _derive_batch_tile(requested, B, n_emb, nump, k_pad, f_emb_pad, budget_bytes):
    bt = min(_round_up(max(requested, 8), 8), _round_up(B, 8))
    w_bytes = 2 * k_pad * f_emb_pad * 4                    # resident table (with slack)

    def footprint(b):
        streamed = 2 * b * (n_emb + 2 * nump + f_emb_pad) * 4   # double-buffered blocks
        temps = b * (128 + f_emb_pad) * 4                        # one-hot + accumulator
        return streamed + temps + w_bytes

    while bt > 8 and footprint(bt) > budget_bytes:
        bt = max(8, (bt // 2) // 8 * 8)
    return bt


def dense_feature_layer(numeric, idx, tables, gamma, beta, eps=1e-5,
                        batch_tile=1024, mxu_dtype=jnp.bfloat16):
    """numeric: (B, n_numeric) f32; idx: (B, n_emb) i32; tables: list of (V_j, emb_dim) f32;
    gamma/beta: (1, F) f32 with F = n_numeric + n_emb * emb_dim."""
    B, n_num = numeric.shape
    n_emb = len(tables)
    emb_dim = int(tables[0].shape[1])
    F = n_num + n_emb * emb_dim
    assert gamma.shape == (1, F) and beta.shape == (1, F)
    f32 = jnp.float32

    vocab = [int(t.shape[0]) for t in tables]
    offsets, row = [], 0
    for v in vocab:
        offsets.append(row)
        row += v
    K = row
    K_pad = _round_up(K, 128)
    F_emb = n_emb * emb_dim
    F_emb_pad = _round_up(F_emb, 128)
    NUMP = _round_up(n_num, 128)

    # Static map: which tables have rows inside each 128-row window of the stacked table.
    n_kblocks = K_pad // 128
    emb_blocks = tuple(
        tuple(j for j in range(n_emb)
              if offsets[j] < (kb + 1) * 128 and offsets[j] + vocab[j] > kb * 128)
        for kb in range(n_kblocks))

    vmem_limit = 32 * 1024 * 1024                          # safe on v7x (64 MiB) and v5e/v6e
    Bt = _derive_batch_tile(batch_tile, B, n_emb, NUMP, K_pad, F_emb_pad,
                            budget_bytes=20 * 1024 * 1024)
    B_pad = _round_up(B, Bt)
    n_tiles = B_pad // Bt

    # ---- wrapper-side packing (plain JAX, done once) -----------------------
    # Stacked embedding table only: numeric passthrough no longer goes through the MXU.
    W = jnp.zeros((K_pad, F_emb_pad), f32)
    for j, t in enumerate(tables):
        W = W.at[offsets[j]:offsets[j] + vocab[j],
                 j * emb_dim:(j + 1) * emb_dim].set(t.astype(f32))
    W_mxu = W.astype(mxu_dtype)
    W_stats = W_mxu.astype(f32)      # stats use the same (possibly rounded) values as outputs

    num_p = jnp.zeros((B_pad, NUMP), f32).at[:B, :n_num].set(numeric.astype(f32))
    off_vec = jnp.asarray(offsets, jnp.int32)
    idx_sh = idx.astype(jnp.int32) + off_vec[None, :]
    idx_p = jnp.full((B_pad, n_emb), -1, jnp.int32).at[:B].set(idx_sh)  # padded rows: no hit

    cparams = pltpu.CompilerParams(dimension_semantics=("parallel",),
                                   vmem_limit_bytes=vmem_limit)

    # ---- phase 1: per-tile partial stats (megacore-shardable, no x round trip) ----
    cnt_p, nsum_p, nsq_p = pl.pallas_call(
        functools.partial(_stats_kernel, emb_blocks),
        out_shape=(jax.ShapeDtypeStruct((n_tiles, 1, K_pad), f32),
                   jax.ShapeDtypeStruct((n_tiles, 1, NUMP), f32),
                   jax.ShapeDtypeStruct((n_tiles, 1, NUMP), f32)),
        grid=(n_tiles,),
        in_specs=[pl.BlockSpec((Bt, n_emb), lambda i: (i, 0)),
                  pl.BlockSpec((Bt, NUMP), lambda i: (i, 0))],
        out_specs=(pl.BlockSpec((1, 1, K_pad), lambda i: (i, 0, 0)),
                   pl.BlockSpec((1, 1, NUMP), lambda i: (i, 0, 0)),
                   pl.BlockSpec((1, 1, NUMP), lambda i: (i, 0, 0))),
        compiler_params=cparams,
    )(idx_p, num_p)

    # ---- tiny wrapper JAX: fold counts through the table, build fused scale/shift ----
    inv_b = 1.0 / B
    cnt = cnt_p.reshape(-1, K_pad).sum(axis=0)                        # (K_pad,)
    mean_e = (cnt @ W_stats) * inv_b                                   # (F_emb_pad,)
    var_e = jnp.maximum((cnt @ (W_stats * W_stats)) * inv_b - mean_e * mean_e, 0.0)
    nsum = nsum_p.reshape(-1, NUMP).sum(axis=0)
    nsq = nsq_p.reshape(-1, NUMP).sum(axis=0)
    mean_n = nsum * inv_b
    var_n = jnp.maximum(nsq * inv_b - mean_n * mean_n, 0.0)

    g = gamma.reshape(F).astype(f32)
    b_ = beta.reshape(F).astype(f32)
    g_n = jnp.zeros((NUMP,), f32).at[:n_num].set(g[:n_num])
    b_n = jnp.zeros((NUMP,), f32).at[:n_num].set(b_[:n_num])
    g_e = jnp.zeros((F_emb_pad,), f32).at[:F_emb].set(g[n_num:])
    b_e = jnp.zeros((F_emb_pad,), f32).at[:F_emb].set(b_[n_num:])

    scale_e = g_e * jax.lax.rsqrt(var_e + eps)
    shift_e = b_e - mean_e * scale_e
    scale_n = g_n * jax.lax.rsqrt(var_n + eps)
    shift_n = b_n - mean_n * scale_n

    # ---- phase 2: gather matmul + fused affine normalize (batch-parallel) ----
    out_e, out_n = pl.pallas_call(
        functools.partial(_apply_kernel, emb_blocks, mxu_dtype),
        out_shape=(jax.ShapeDtypeStruct((B_pad, F_emb_pad), f32),
                   jax.ShapeDtypeStruct((B_pad, NUMP), f32)),
        grid=(n_tiles,),
        in_specs=[pl.BlockSpec((Bt, n_emb), lambda i: (i, 0)),
                  pl.BlockSpec((Bt, NUMP), lambda i: (i, 0)),
                  pl.BlockSpec((K_pad, F_emb_pad), lambda i: (0, 0)),   # resident table
                  pl.BlockSpec((1, F_emb_pad), lambda i: (0, 0)),
                  pl.BlockSpec((1, F_emb_pad), lambda i: (0, 0)),
                  pl.BlockSpec((1, NUMP), lambda i: (0, 0)),
                  pl.BlockSpec((1, NUMP), lambda i: (0, 0))],
        out_specs=(pl.BlockSpec((Bt, F_emb_pad), lambda i: (i, 0)),
                   pl.BlockSpec((Bt, NUMP), lambda i: (i, 0))),
        compiler_params=cparams,
    )(idx_p, num_p, W_mxu,
      scale_e.reshape(1, F_emb_pad), shift_e.reshape(1, F_emb_pad),
      scale_n.reshape(1, NUMP), shift_n.reshape(1, NUMP))

    # Reassemble the module's [numeric | emb_0 | emb_1 | ...] column order.
    return jnp.concatenate([out_n[:B, :n_num], out_e[:B, :F_emb]], axis=1)


def _reference(numeric, idx, tables, gamma, beta, eps=1e-5, table_dtype=jnp.float32):
    tabs = [t.astype(table_dtype).astype(jnp.float32) for t in tables]
    emb = jnp.concatenate([tabs[j][idx[:, j]] for j in range(len(tabs))], axis=1)
    x = jnp.concatenate([numeric, emb], axis=1)
    mean = jnp.mean(x, axis=0, keepdims=True)
    var = jnp.mean((x - mean) ** 2, axis=0, keepdims=True)
    return (x - mean) / jnp.sqrt(var + eps) * gamma + beta


if __name__ == "__main__":
    key = jax.random.PRNGKey(0)

    B = 8                        # batch
    numeric_columns = 3          # numeric feature columns
    nrof_cat = [11, 7, 5]        # vocab sizes for the 3 embedding columns
    emb_dim = 4
    input_size = numeric_columns + len(nrof_cat) * emb_dim   # 15 (BatchNorm1d size)

    k_num, k_idx, k_tab, k_g, k_b = jax.random.split(key, 5)
    numeric = jax.random.normal(k_num, (B, numeric_columns), dtype=jnp.float32)
    idx = jnp.stack(
        [jax.random.randint(jax.random.fold_in(k_idx, j), (B,), 0, nrof_cat[j], dtype=jnp.int32)
         for j in range(len(nrof_cat))],
        axis=1,
    )  # (B, n_emb) int32
    tables = [
        jax.random.normal(jax.random.fold_in(k_tab, j), (nrof_cat[j], emb_dim), dtype=jnp.float32)
        for j in range(len(nrof_cat))
    ]
    gamma = 1.0 + 0.1 * jax.random.normal(k_g, (1, input_size), dtype=jnp.float32)
    beta = 0.1 * jax.random.normal(k_b, (1, input_size), dtype=jnp.float32)

    # bf16 MXU path (perf default): compare against a reference whose table values are
    # rounded to bf16 (the only values the kernel rounds; one-hot/stats stay exact f32).
    out_bf16 = jax.block_until_ready(
        dense_feature_layer(numeric, idx, tables, gamma, beta, mxu_dtype=jnp.bfloat16))
    ref_bf16 = _reference(numeric, idx, tables, gamma, beta, table_dtype=jnp.bfloat16)
    assert out_bf16.shape == (B, input_size)
    assert jnp.allclose(out_bf16, ref_bf16, atol=2e-4, rtol=2e-4), "bf16 path mismatch"

    # f32 MXU path: bit-level parity check against the pure f32 reference.
    out_f32 = jax.block_until_ready(
        dense_feature_layer(numeric, idx, tables, gamma, beta, mxu_dtype=jnp.float32))
    ref_f32 = _reference(numeric, idx, tables, gamma, beta)
    assert jnp.allclose(out_f32, ref_f32, atol=1e-4, rtol=1e-4), "f32 path mismatch"

    # TODO(synk): BatchNorm1d running_mean/running_var momentum-EMA buffer updates are not
    # materialized; only the training-mode forward output is produced.
    print("KERNEL_OK")
</pallas_src>

<mosaic_0001>
module attributes {stable_mosaic.version = 11 : i64} {
  func.func @_stats_kernel(%arg0: i32, %arg1: memref<8x3xi32, #tpu.memory_space<vmem>>, %arg2: memref<8x128xf32, #tpu.memory_space<vmem>>, %arg3: memref<1x1x128xf32, #tpu.memory_space<vmem>>, %arg4: memref<1x1x128xf32, #tpu.memory_space<vmem>>, %arg5: memref<1x1x128xf32, #tpu.memory_space<vmem>>) attributes {dimension_semantics = [#tpu.dimension_semantics<parallel>], iteration_bounds = array<i64: 1>, scalar_prefetch = 0 : i64, scratch_operands = 0 : i64, tpu.core_type = #tpu.core_type<tc>, window_params = [{transform_indices = @transform_0, window_bounds = array<i64: 8, 3>}, {transform_indices = @transform_1, window_bounds = array<i64: 8, 128>}, {transform_indices = @transform_2, window_bounds = array<i64: 1, 1, 128>}, {transform_indices = @transform_3, window_bounds = array<i64: 1, 1, 128>}, {transform_indices = @transform_4, window_bounds = array<i64: 1, 1, 128>}]} {
    %c0 = arith.constant 0 : index
    %c0_0 = arith.constant 0 : index
    %0 = vector.load %arg1[%c0, %c0_0] : memref<8x3xi32, #tpu.memory_space<vmem>>, vector<8x3xi32>
    %cst = arith.constant 1.000000e+00 : f32
    %1 = vector.broadcast %cst : f32 to vector<1x8xf32>
    %2 = tpu.iota {dimensions = array<i32: 1>} : vector<8x128xi32>
    %c0_i32 = arith.constant 0 : i32
    %3 = vector.broadcast %c0_i32 : i32 to vector<8x128xi32>
    %4 = arith.addi %2, %3 : vector<8x128xi32>
    %cst_1 = arith.constant 0.000000e+00 : f32
    %5 = vector.broadcast %cst_1 : f32 to vector<8x128xf32>
    %6 = vector.extract_strided_slice %0 {offsets = [0, 0], sizes = [8, 1], strides = [1, 1]} : vector<8x3xi32> to vector<8x1xi32>
    %7 = vector.broadcast %6 : vector<8x1xi32> to vector<8x128xi32>
    %8 = arith.cmpi eq, %4, %7 : vector<8x128xi32>
    %9 = arith.extui %8 : vector<8x128xi1> to vector<8x128xi32>
    %10 = arith.sitofp %9 : vector<8x128xi32> to vector<8x128xf32>
    %11 = arith.addf %5, %10 : vector<8x128xf32>
    %12 = vector.extract_strided_slice %0 {offsets = [0, 1], sizes = [8, 1], strides = [1, 1]} : vector<8x3xi32> to vector<8x1xi32>
    %13 = vector.broadcast %12 : vector<8x1xi32> to vector<8x128xi32>
    %14 = arith.cmpi eq, %4, %13 : vector<8x128xi32>
    %15 = arith.extui %14 : vector<8x128xi1> to vector<8x128xi32>
    %16 = arith.sitofp %15 : vector<8x128xi32> to vector<8x128xf32>
    %17 = arith.addf %11, %16 : vector<8x128xf32>
    %18 = vector.extract_strided_slice %0 {offsets = [0, 2], sizes = [8, 1], strides = [1, 1]} : vector<8x3xi32> to vector<8x1xi32>
    %19 = vector.broadcast %18 : vector<8x1xi32> to vector<8x128xi32>
    %20 = arith.cmpi eq, %4, %19 : vector<8x128xi32>
    %21 = arith.extui %20 : vector<8x128xi1> to vector<8x128xi32>
    %22 = arith.sitofp %21 : vector<8x128xi32> to vector<8x128xf32>
    %23 = arith.addf %17, %22 : vector<8x128xf32>
    %cst_2 = arith.constant dense<0.000000e+00> : vector<1x128xf32>
    %24 = tpu.matmul %1, %23, %cst_2 {dimension_numbers = #tpu.dot_dimension_numbers<[1], [0], [0], [1], [0, 0, 1, 1], [], []>} : vector<1x8xf32>, vector<8x128xf32>, vector<1x128xf32> -> vector<1x128xf32>
    %c0_3 = arith.constant 0 : index
    %c0_4 = arith.constant 0 : index
    %c0_5 = arith.constant 0 : index
    %25 = vector.load %arg3[%c0_3, %c0_4, %c0_5] : memref<1x1x128xf32, #tpu.memory_space<vmem>>, vector<1x1x128xf32>
    %26 = vector.shape_cast %25 : vector<1x1x128xf32> to vector<1x128xf32>
    %27 = vector.shape_cast %24 : vector<1x128xf32> to vector<1x1x128xf32>
    tpu.vector_store %arg3[%c0_3, %c0_4, %c0_5], %27 {strides = array<i32>} : memref<1x1x128xf32, #tpu.memory_space<vmem>>, vector<1x1x128xf32>,
    %c0_6 = arith.constant 0 : index
    %c0_7 = arith.constant 0 : index
    %28 = vector.load %arg2[%c0_6, %c0_7] : memref<8x128xf32, #tpu.memory_space<vmem>>, vector<8x128xf32>
    %cst_8 = arith.constant dense<0.000000e+00> : vector<1x128xf32>
    %29 = tpu.matmul %1, %28, %cst_8 {dimension_numbers = #tpu.dot_dimension_numbers<[1], [0], [0], [1], [0, 0, 1, 1], [], []>} : vector<1x8xf32>, vector<8x128xf32>, vector<1x128xf32> -> vector<1x128xf32>
    %c0_9 = arith.constant 0 : index
    %c0_10 = arith.constant 0 : index
    %c0_11 = arith.constant 0 : index
    %30 = vector.load %arg4[%c0_9, %c0_10, %c0_11] : memref<1x1x128xf32, #tpu.memory_space<vmem>>, vector<1x1x128xf32>
    %31 = vector.shape_cast %30 : vector<1x1x128xf32> to vector<1x128xf32>
    %32 = vector.shape_cast %29 : vector<1x128xf32> to vector<1x1x128xf32>
    tpu.vector_store %arg4[%c0_9, %c0_10, %c0_11], %32 {strides = array<i32>} : memref<1x1x128xf32, #tpu.memory_space<vmem>>, vector<1x1x128xf32>,
    %33 = arith.mulf %28, %28 : vector<8x128xf32>
    %cst_12 = arith.constant dense<0.000000e+00> : vector<1x128xf32>
    %34 = tpu.matmul %1, %33, %cst_12 {dimension_numbers = #tpu.dot_dimension_numbers<[1], [0], [0], [1], [0, 0, 1, 1], [], []>} : vector<1x8xf32>, vector<8x128xf32>, vector<1x128xf32> -> vector<1x128xf32>
    %c0_13 = arith.constant 0 : index
    %c0_14 = arith.constant 0 : index
    %c0_15 = arith.constant 0 : index
    %35 = vector.load %arg5[%c0_13, %c0_14, %c0_15] : memref<1x1x128xf32, #tpu.memory_space<vmem>>, vector<1x1x128xf32>
    %36 = vector.shape_cast %35 : vector<1x1x128xf32> to vector<1x128xf32>
    %37 = vector.shape_cast %34 : vector<1x128xf32> to vector<1x1x128xf32>
    tpu.vector_store %arg5[%c0_13, %c0_14, %c0_15], %37 {strides = array<i32>} : memref<1x1x128xf32, #tpu.memory_space<vmem>>, vector<1x1x128xf32>,
    return
  }
  func.func @transform_0(%arg0: i32) -> (i32, i32) {
    %c0_i32 = arith.constant 0 : i32
    %c0_i32_0 = arith.constant 0 : i32
    return %arg0, %c0_i32 : i32, i32
  }
  func.func @transform_1(%arg0: i32) -> (i32, i32) {
    %c0_i32 = arith.constant 0 : i32
    %c0_i32_0 = arith.constant 0 : i32
    return %arg0, %c0_i32 : i32, i32
  }
  func.func @transform_2(%arg0: i32) -> (i32, i32, i32) {
    %c0_i32 = arith.constant 0 : i32
    %c0_i32_0 = arith.constant 0 : i32
    %c0_i32_1 = arith.constant 0 : i32
    return %arg0, %c0_i32, %c0_i32_0 : i32, i32, i32
  }
  func.func @transform_3(%arg0: i32) -> (i32, i32, i32) {
    %c0_i32 = arith.constant 0 : i32
    %c0_i32_0 = arith.constant 0 : i32
    %c0_i32_1 = arith.constant 0 : i32
    return %arg0, %c0_i32, %c0_i32_0 : i32, i32, i32
  }
  func.func @transform_4(%arg0: i32) -> (i32, i32, i32) {
    %c0_i32 = arith.constant 0 : i32
    %c0_i32_0 = arith.constant 0 : i32
    %c0_i32_1 = arith.constant 0 : i32
    return %arg0, %c0_i32, %c0_i32_0 : i32, i32, i32
  }
}

</mosaic_0001>

<llo_original>
// kernel: tpu_custom_call.1
$region0: #{tpu_custom_call.1}
  #allocation0 [shape = 'u32[]', space=smem, size = 0x4, offset = 0x4, fixed_abs, tag = 'smem constant byte address 0x4 - core index']
  #allocation1 [shape = 'u32[144,128]{1,0:T(1,128)}', space=vmem, size = 0x12000, scoped, tag = 'internal scratch']
  %s0 = inlined_call_operand.vmem [shape: s32[8,3], index: 0, kind: input, shape index: {}]
  %s1 = inlined_call_operand.vmem [shape: f32[8,128], index: 1, kind: input, shape index: {}]
  %s2 = inlined_call_operand.hbm [shape: f32[1,1,128], index: 2, kind: output, shape index: {0}]
  %s3 = inlined_call_operand.hbm [shape: f32[1,1,128], index: 3, kind: output, shape index: {1}]
  %s4 = inlined_call_operand.hbm [shape: f32[1,1,128], index: 4, kind: output, shape index: {2}]
  %5 = xla_tuple %s2, %s3, %s4
  %s6 = sld [smem:[#allocation0]]
  $region34: #{tpu_custom_call.1} parent=0
    _
  %s8 = ssub.s32 1, %s6
  %s9 = scalar_select 0, %s8, %s6
  $region1: #{tpu_custom_call.1} parent=0
    #allocation2 [shape = 'u8[512]{0}', space=vmem, size = 0x400, scoped, tag = 'output window, operand 0, single buffered']
    #allocation3 [shape = 's32[1]{0}', space=sflag, size = 0x4, scoped, tag = 'scoped memory for tpu_custom_call.1']
    #allocation4 [shape = 'u8[512]{0}', space=vmem, size = 0x400, scoped, tag = 'output window, operand 1, single buffered']
    #allocation5 [shape = 's32[1]{0}', space=sflag, size = 0x4, scoped, tag = 'scoped memory for tpu_custom_call.1']
    #allocation6 [shape = 'u8[512]{0}', space=vmem, size = 0x400, scoped, tag = 'output window, operand 2, single buffered']
    %10 = vsyncpa [#allocation3], 0
    %11 = vsyncpa [#allocation5], 0
    // Predicated region
    $region2: #{tpu_custom_call.1} parent=1 // pred_check
      _
    $region3: #{tpu_custom_call.1} parent=1 // pred_check_branch
      %13 = sbr.rel (0) target = $region5
    $region4: #{tpu_custom_call.1} parent=1 // pred_region
      _
    $region5: #{tpu_custom_call.1} parent=1 // pred_fallthru
      _
    // Predicated region
    $region6: #{tpu_custom_call.1} parent=1 // pred_check
      _
    $region7: #{tpu_custom_call.1} parent=1 // pred_check_branch
      %15 = sbr.rel (0) target = $region9
    $region8: #{tpu_custom_call.1} parent=1 // pred_region
      _
    $region9: #{tpu_custom_call.1} parent=1 // pred_fallthru
      _
    %v16 = vld [vmem:[%s0] sm:$0xff]
    %v17 = vlaneseq
    %v18 = vand.u32 %v17, 127
    %19 = vset.pattern.permute.xlu0 0
    %20 = vperm.xlu0 %19, %v16
    %v21 = vpop.permute.xlu0 %20
    %vm22 = vcmp.eq.s32.totalorder %v18, %v21
    %v23 = vsel %vm22, 1, 0
    %v24 = vcvt.s32.f32 %v23
    %v25 = vadd.f32 %v24, 0.0
    %26 = vset.pattern.permute.xlu0 1
    %27 = vperm.xlu0 %26, %v16
    %v28 = vpop.permute.xlu0 %27
    %vm29 = vcmp.eq.s32.totalorder %v18, %v28
    %v30 = vsel %vm29, 1, 0
    %v31 = vcvt.s32.f32 %v30
    %v32 = vadd.f32 %v25, %v31
    %33 = vset.pattern.permute.xlu0 2
    %34 = vperm.xlu0 %33, %v16
    %v35 = vpop.permute.xlu0 %34
    %vm36 = vcmp.eq.s32.totalorder %v18, %v35
    %v37 = vsel %vm36, 1, 0
    %v38 = vcvt.s32.f32 %v37
    %v39 = vadd.f32 %v32, %v38
    %vm40 = vcmask 64512
    %v42 = vsel %vm40, 1.0, 0
    %44 = vmatprep.subr.mxu0 0.0
    %45 = vmatpush1.msra.mxu0 0.0
    %46 = vmatprep.subr.mxu0 0.0
    %47 = vmatpush1.msra.mxu0 0.0
    %48 = vmatprep.subr.mxu0 0.0
    %49 = vmatpush1.msra.mxu0 0.0
    %50 = vmatprep.subr.mxu0 0.0
    %51 = vmatpush1.msra.mxu0 0.0
    %52 = vmatprep.subr.mxu0 0.0
    %53 = vmatpush1.msra.mxu0 0.0
    %54 = vmatprep.subr.mxu0 0.0
    %55 = vmatpush1.msra.mxu0 0.0
    %56 = vmatprep.subr.mxu0 0.0
    %57 = vmatpush1.msra.mxu0 0.0
    %58 = vmatprep.subr.mxu0 0.0
    %59 = vmatpush1.msra.mxu0 0.0
    %60 = vmatprep.subr.mxu0 0.0
    %61 = vmatpush1.msra.mxu0 0.0
    %62 = vmatprep.subr.mxu0 0.0
    %63 = vmatpush1.msra.mxu0 0.0
    %64 = vmatprep.subr.mxu0 0.0
    %65 = vmatpush1.msra.mxu0 0.0
    %66 = vmatprep.subr.mxu0 0.0
    %67 = vmatpush1.msra.mxu0 0.0
    %68 = vmatprep.subr.mxu0 0.0
    %69 = vmatpush1.msra.mxu0 0.0
    %70 = vmatprep.subr.mxu0 0.0
    %71 = vmatpush1.msra.mxu0 0.0
    %72 = vmatprep.subr.mxu0 0.0
    %73 = vmatpush1.msra.mxu0 0.0
    %74 = vmatprep.subr.mxu0 0.0
    %75 = vmatpush1.msra.mxu0 %v39
    %76 = vmatprep.subr.mxu0 0.0
    %77 = vmatpush2.msra.mxu0 0.0
    %78 = vmatprep.subr.mxu0 0.0
    %79 = vmatpush2.msra.mxu0 0.0
    %80 = vmatprep.subr.mxu0 0.0
    %81 = vmatpush2.msra.mxu0 0.0
    %82 = vmatprep.subr.mxu0 0.0
    %83 = vmatpush2.msra.mxu0 0.0
    %84 = vmatprep.subr.mxu0 0.0
    %85 = vmatpush2.msra.mxu0 0.0
    %86 = vmatprep.subr.mxu0 0.0
    %87 = vmatpush2.msra.mxu0 0.0
    %88 = vmatprep.subr.mxu0 0.0
    %89 = vmatpush2.msra.mxu0 0.0
    %90 = vmatprep.subr.mxu0 0.0
    %91 = vmatpush2.msra.mxu0 0.0
    %92 = vmatprep.subr.mxu0 0.0
    %93 = vmatpush2.msra.mxu0 0.0
    %94 = vmatprep.subr.mxu0 0.0
    %95 = vmatpush2.msra.mxu0 0.0
    %96 = vmatprep.subr.mxu0 0.0
    %97 = vmatpush2.msra.mxu0 0.0
    %98 = vmatprep.subr.mxu0 0.0
    %99 = vmatpush2.msra.mxu0 0.0
    %100 = vmatprep.subr.mxu0 0.0
    %101 = vmatpush2.msra.mxu0 0.0
    %102 = vmatprep.subr.mxu0 0.0
    %103 = vmatpush2.msra.mxu0 0.0
    %104 = vmatprep.subr.mxu0 0.0
    %105 = vmatpush2.msra.mxu0 0.0
    %106 = vmatprep.subr.mxu0 0.0
    %107 = vmatpush2.msra.mxu0 0.0
    %108 = vmatprep.mubr.f32.mxu0 0.0
    %109 = vmatmul.mubr.f32.gmra.mxu0 %v42
    %v110 = vpop.f32.mrf.mxu0
    %v111 = vadd.f32 0.0, %v110
    %v112 = vpop.f32.mrf.mxu0
    %113 = vdwg.mxu0
    %114 = vst [vmem:[#allocation2] sm:$0x1] %v111
    %v115 = vld [vmem:[%s1] sm:$0xff]
    %116 = vmatprep.subr.mxu0 0.0
    %117 = vmatpush1.msra.mxu0 0.0
    %118 = vmatprep.subr.mxu0 0.0
    %119 = vmatpush1.msra.mxu0 0.0
    %120 = vmatprep.subr.mxu0 0.0
    %121 = vmatpush1.msra.mxu0 0.0
    %122 = vmatprep.subr.mxu0 0.0
    %123 = vmatpush1.msra.mxu0 0.0
    %124 = vmatprep.subr.mxu0 0.0
    %125 = vmatpush1.msra.mxu0 0.0
    %126 = vmatprep.subr.mxu0 0.0
    %127 = vmatpush1.msra.mxu0 0.0
    %128 = vmatprep.subr.mxu0 0.0
    %129 = vmatpush1.msra.mxu0 0.0
    %130 = vmatprep.subr.mxu0 0.0
    %131 = vmatpush1.msra.mxu0 0.0
    %132 = vmatprep.subr.mxu0 0.0
    %133 = vmatpush1.msra.mxu0 0.0
    %134 = vmatprep.subr.mxu0 0.0
    %135 = vmatpush1.msra.mxu0 0.0
    %136 = vmatprep.subr.mxu0 0.0
    %137 = vmatpush1.msra.mxu0 0.0
    %138 = vmatprep.subr.mxu0 0.0
    %139 = vmatpush1.msra.mxu0 0.0
    %140 = vmatprep.subr.mxu0 0.0
    %141 = vmatpush1.msra.mxu0 0.0
    %142 = vmatprep.subr.mxu0 0.0
    %143 = vmatpush1.msra.mxu0 0.0
    %144 = vmatprep.subr.mxu0 0.0
    %145 = vmatpush1.msra.mxu0 0.0
    %146 = vmatprep.subr.mxu0 0.0
    %147 = vmatpush1.msra.mxu0 %v115
    %148 = vmatprep.subr.mxu0 0.0
    %149 = vmatpush2.msra.mxu0 0.0
    %150 = vmatprep.subr.mxu0 0.0
    %151 = vmatpush2.msra.mxu0 0.0
    %152 = vmatprep.subr.mxu0 0.0
    %153 = vmatpush2.msra.mxu0 0.0
    %154 = vmatprep.subr.mxu0 0.0
    %155 = vmatpush2.msra.mxu0 0.0
    %156 = vmatprep.subr.mxu0 0.0
    %157 = vmatpush2.msra.mxu0 0.0
    %158 = vmatprep.subr.mxu0 0.0
    %159 = vmatpush2.msra.mxu0 0.0
    %160 = vmatprep.subr.mxu0 0.0
    %161 = vmatpush2.msra.mxu0 0.0
    %162 = vmatprep.subr.mxu0 0.0
    %163 = vmatpush2.msra.mxu0 0.0
    %164 = vmatprep.subr.mxu0 0.0
    %165 = vmatpush2.msra.mxu0 0.0
    %166 = vmatprep.subr.mxu0 0.0
    %167 = vmatpush2.msra.mxu0 0.0
    %168 = vmatprep.subr.mxu0 0.0
    %169 = vmatpush2.msra.mxu0 0.0
    %170 = vmatprep.subr.mxu0 0.0
    %171 = vmatpush2.msra.mxu0 0.0
    %172 = vmatprep.subr.mxu0 0.0
    %173 = vmatpush2.msra.mxu0 0.0
    %174 = vmatprep.subr.mxu0 0.0
    %175 = vmatpush2.msra.mxu0 0.0
    %176 = vmatprep.subr.mxu0 0.0
    %177 = vmatpush2.msra.mxu0 0.0
    %178 = vmatprep.subr.mxu0 0.0
    %179 = vmatpush2.msra.mxu0 0.0
    %180 = vmatprep.mubr.f32.mxu0 0.0
    %181 = vmatmul.mubr.f32.gmra.mxu0 %v42
    %v182 = vpop.f32.mrf.mxu0
    %v183 = vadd.f32 0.0, %v182
    %v184 = vpop.f32.mrf.mxu0
    %185 = vdwg.mxu0
    %186 = vst [vmem:[#allocation4] sm:$0x1] %v183
    %v187 = vmul.f32 %v115, %v115
    %188 = vmatprep.subr.mxu0 0.0
    %189 = vmatpush1.msra.mxu0 0.0
    %190 = vmatprep.subr.mxu0 0.0
    %191 = vmatpush1.msra.mxu0 0.0
    %192 = vmatprep.subr.mxu0 0.0
    %193 = vmatpush1.msra.mxu0 0.0
    %194 = vmatprep.subr.mxu0 0.0
    %195 = vmatpush1.msra.mxu0 0.0
    %196 = vmatprep.subr.mxu0 0.0
    %197 = vmatpush1.msra.mxu0 0.0
    %198 = vmatprep.subr.mxu0 0.0
    %199 = vmatpush1.msra.mxu0 0.0
    %200 = vmatprep.subr.mxu0 0.0
    %201 = vmatpush1.msra.mxu0 0.0
    %202 = vmatprep.subr.mxu0 0.0
    %203 = vmatpush1.msra.mxu0 0.0
    %204 = vmatprep.subr.mxu0 0.0
    %205 = vmatpush1.msra.mxu0 0.0
    %206 = vmatprep.subr.mxu0 0.0
    %207 = vmatpush1.msra.mxu0 0.0
    %208 = vmatprep.subr.mxu0 0.0
    %209 = vmatpush1.msra.mxu0 0.0
    %210 = vmatprep.subr.mxu0 0.0
    %211 = vmatpush1.msra.mxu0 0.0
    %212 = vmatprep.subr.mxu0 0.0
    %213 = vmatpush1.msra.mxu0 0.0
    %214 = vmatprep.subr.mxu0 0.0
    %215 = vmatpush1.msra.mxu0 0.0
    %216 = vmatprep.subr.mxu0 0.0
    %217 = vmatpush1.msra.mxu0 0.0
    %218 = vmatprep.subr.mxu0 0.0
    %219 = vmatpush1.msra.mxu0 %v187
    %220 = vmatprep.subr.mxu0 0.0
    %221 = vmatpush2.msra.mxu0 0.0
    %222 = vmatprep.subr.mxu0 0.0
    %223 = vmatpush2.msra.mxu0 0.0
    %224 = vmatprep.subr.mxu0 0.0
    %225 = vmatpush2.msra.mxu0 0.0
    %226 = vmatprep.subr.mxu0 0.0
    %227 = vmatpush2.msra.mxu0 0.0
    %228 = vmatprep.subr.mxu0 0.0
    %229 = vmatpush2.msra.mxu0 0.0
    %230 = vmatprep.subr.mxu0 0.0
    %231 = vmatpush2.msra.mxu0 0.0
    %232 = vmatprep.subr.mxu0 0.0
    %233 = vmatpush2.msra.mxu0 0.0
    %234 = vmatprep.subr.mxu0 0.0
    %235 = vmatpush2.msra.mxu0 0.0
    %236 = vmatprep.subr.mxu0 0.0
    %237 = vmatpush2.msra.mxu0 0.0
    %238 = vmatprep.subr.mxu0 0.0
    %239 = vmatpush2.msra.mxu0 0.0
    %240 = vmatprep.subr.mxu0 0.0
    %241 = vmatpush2.msra.mxu0 0.0
    %242 = vmatprep.subr.mxu0 0.0
    %243 = vmatpush2.msra.mxu0 0.0
    %244 = vmatprep.subr.mxu0 0.0
    %245 = vmatpush2.msra.mxu0 0.0
    %246 = vmatprep.subr.mxu0 0.0
    %247 = vmatpush2.msra.mxu0 0.0
    %248 = vmatprep.subr.mxu0 0.0
    %249 = vmatpush2.msra.mxu0 0.0
    %250 = vmatprep.subr.mxu0 0.0
    %251 = vmatpush2.msra.mxu0 0.0
    %252 = vmatprep.mubr.f32.mxu0 0.0
    %253 = vmatmul.mubr.f32.gmra.mxu0 %v42
    %v254 = vpop.f32.mrf.mxu0
    %v255 = vadd.f32 0.0, %v254
    %v256 = vpop.f32.mrf.mxu0
    %257 = vdwg.mxu0
    %258 = vst [vmem:[#allocation6] sm:$0x1] %v255
    // Predicated region
    $region10: #{tpu_custom_call.1} parent=1 // pred_check
      _
    $region11: #{tpu_custom_call.1} parent=1 // pred_check_branch
      %260 = sbr.rel (0) target = $region13
    $region12: #{tpu_custom_call.1} parent=1 // pred_region
      %s262 = ssub.s32 16, 16
      %263 = vsyncadd [#allocation3], %s262
      %s265 = sshll.u32 [#allocation2], 4
      %s266 = int_to_ptr.vmem [resolvable:$true] %s265
      %268 = dma.vmem_to_hbm [thread:$0]  %s266, 16, %s2, [#allocation3]
    $region13: #{tpu_custom_call.1} parent=1 // pred_fallthru
      _
    // Predicated region
    $region14: #{tpu_custom_call.1} parent=1 // pred_check
      _
    $region15: #{tpu_custom_call.1} parent=1 // pred_check_branch
      %270 = sbr.rel (0) target = $region17
    $region16: #{tpu_custom_call.1} parent=1 // pred_region
      %s272 = ssub.s32 16, 16
      %273 = vsyncadd [#allocation5], %s272
      %s275 = sshll.u32 [#allocation4], 4
      %s276 = int_to_ptr.vmem [resolvable:$true] %s275
      %278 = dma.vmem_to_hbm [thread:$0]  %s276, 16, %s3, [#allocation5]
    $region17: #{tpu_custom_call.1} parent=1 // pred_fallthru
      _
    // Predicated region
    $region18: #{tpu_custom_call.1} parent=1 // pred_check
      _
    $region19: #{tpu_custom_call.1} parent=1 // pred_check_branch
      %280 = sbr.rel (0) target = $region21
    $region20: #{tpu_custom_call.1} parent=1 // pred_region
      %s282 = ssub.s32 16, 16
      %283 = vsyncadd [#allocation5], %s282
      %s285 = sshll.u32 [#allocation6], 4
      %s286 = int_to_ptr.vmem [resolvable:$true] %s285
      %288 = dma.vmem_to_hbm [thread:$0]  %s286, 16, %s4, [#allocation5]
    $region21: #{tpu_custom_call.1} parent=1 // pred_fallthru
      _
    // Predicated region
    $region22: #{tpu_custom_call.1} parent=1 // pred_check
      _
    $region23: #{tpu_custom_call.1} parent=1 // pred_check_branch
      %290 = sbr.rel (0) target = $region25
    $region24: #{tpu_custom_call.1} parent=1 // pred_region
      %291 = dma.done [#allocation3], 16
    $region25: #{tpu_custom_call.1} parent=1 // pred_fallthru
      _
    // Predicated region
    $region26: #{tpu_custom_call.1} parent=1 // pred_check
      _
    $region27: #{tpu_custom_call.1} parent=1 // pred_check_branch
      %293 = sbr.rel (0) target = $region29
    $region28: #{tpu_custom_call.1} parent=1 // pred_region
      %294 = dma.done [#allocation5], 16
    $region29: #{tpu_custom_call.1} parent=1 // pred_fallthru
      _
    // Predicated region
    $region30: #{tpu_custom_call.1} parent=1 // pred_check
      _
    $region31: #{tpu_custom_call.1} parent=1 // pred_check_branch
      %296 = sbr.rel (0) target = $region33
    $region32: #{tpu_custom_call.1} parent=1 // pred_region
      %297 = dma.done [#allocation5], 16
    $region33: #{tpu_custom_call.1} parent=1 // pred_fallthru
      _
    %298 = vsyncpa [#allocation3], 1
    %299 = vsyncpa [#allocation5], 1

</llo_original>
